<compile_context>
chip_gen: v7x
topology: tpu7x:2x2x1
jax: 0.10.0
libtpu: 0.0.40
codegen_flags: <defaults>
</compile_context>

<pallas_src>
import random

import jax
import jax.numpy as jnp
import numpy as np
from jax.experimental import pallas as pl
from jax.experimental.pallas import tpu as pltpu

_SUBLANE = 8
_MIN_STEP_BYTES = 2 << 20     # >= ~2 MiB per grid step amortises the ~0.35 us step cost
_VMEM_BUDGET = 20 << 20       # M + double-buffered blocks stay under this
_VMEM_LIMIT = 32 << 20        # raised scoped VMEM (safe on v5e/v6e/v7x)


def _round_up(x: int, m: int) -> int:
    return (x + m - 1) // m * m


def _interp_matrix(old_len: int, new_len: int) -> np.ndarray:
    """(new_len, old_len) float64 weights: W @ x == linear resample of x from
    linspace(0,1,old_len) onto linspace(0,1,new_len) (scipy interp1d 'linear')."""
    pos = np.linspace(0.0, 1.0, new_len, dtype=np.float64) * (old_len - 1)
    lo = np.clip(np.floor(pos).astype(np.int64), 0, old_len - 1)
    hi = np.clip(lo + 1, 0, old_len - 1)
    frac = pos - lo
    w = np.zeros((new_len, old_len), dtype=np.float64)
    rows = np.arange(new_len)
    np.add.at(w, (rows, lo), 1.0 - frac)
    np.add.at(w, (rows, hi), frac)
    return w


def _fused_resample_matrix(L: int, target_len: int, factor: float) -> np.ndarray:
    """Fused (target_len, L) float64 matrix for L -> L_new -> target_len."""
    L_new = max(2, int(L * factor))
    return _interp_matrix(L_new, target_len) @ _interp_matrix(L, L_new)


def _warp_kron_matrix(L: int, F: int, target_len: int, factor: float) -> jnp.ndarray:
    """M = W^T (x) I_F, shape (L*F, T*F), f32 — lets the kernel consume the
    natural (B, L, J, 2) layout with zero host-side transposes."""
    w = _fused_resample_matrix(L, target_len, factor)           # (T, L) f64
    m = np.kron(w.T, np.eye(F, dtype=np.float64))               # (L*F, T*F)
    return jnp.asarray(m.astype(np.float32))


def _timewarp_kernel(x_ref, m_ref, o_ref):
    # OUT[b, n] = sum_k X[b, k] * M[k, n] — one MXU pass, f32 accumulation.
    o_ref[...] = jnp.dot(
        x_ref[...], m_ref[...], preferred_element_type=jnp.float32
    ).astype(o_ref.dtype)


def _pick_batch_tile(B: int, row_bytes: int, mat_bytes: int) -> int:
    """Batch (sublane) tile: multiple of 8, fits the VMEM budget (double-buffered
    in+out blocks plus resident M), big enough to amortise step overhead, and
    split in two when a single step would otherwise cover the whole batch."""
    budget = max(_VMEM_BUDGET - mat_bytes, 2 << 20)
    max_bt = max(_SUBLANE, (budget // (2 * row_bytes)) // _SUBLANE * _SUBLANE)
    min_bt = _round_up(max(_MIN_STEP_BYTES // row_bytes, 1), _SUBLANE)
    full = (B // _SUBLANE) * _SUBLANE          # largest aligned tile not exceeding B
    bt = min(full, max_bt)
    if pl.cdiv(B, bt) == 1 and bt >= 2 * min_bt:
        # Whole batch would be one step; split so both v7x TensorCores get work.
        bt = max(min_bt, _round_up(bt // 2, _SUBLANE))
    return max(bt, _SUBLANE)


def _resample_pallas(x: jnp.ndarray, m: jnp.ndarray,
                     out_dtype=jnp.float32) -> jnp.ndarray:
    """x: (B, K) f32, m: (K, N) f32 -> (B, N) via one batch-tiled pallas_call."""
    B, K = x.shape
    K2, N = m.shape
    assert K == K2
    itemsize = 4
    row_bytes = (K + N) * itemsize             # one batch row of (input + output) block
    mat_bytes = K * N * itemsize
    bt = _pick_batch_tile(B, row_bytes, mat_bytes)
    grid = (pl.cdiv(B, bt),)                   # partial last block masked by Pallas

    return pl.pallas_call(
        _timewarp_kernel,
        out_shape=jax.ShapeDtypeStruct((B, N), out_dtype),
        grid=grid,
        in_specs=[
            pl.BlockSpec((bt, K), lambda i: (i, 0)),   # batch tile of X
            pl.BlockSpec((K, N), lambda i: (0, 0)),    # M: constant index -> VMEM-resident
        ],
        out_specs=pl.BlockSpec((bt, N), lambda i: (i, 0)),
        compiler_params=pltpu.CompilerParams(
            dimension_semantics=("parallel",),         # batch axis is independent
            vmem_limit_bytes=_VMEM_LIMIT),
    )(x, m)


def time_warp_batch(seqs: jnp.ndarray,
                    min_scale: float = 0.9,
                    max_scale: float = 1.1,
                    target_len: int = 32,
                    rng_seed: int = 0,
                    factor: float = None,
                    min_batch_for_pallas: int = 8,
                    out_dtype=jnp.float32) -> jnp.ndarray:
    """(B, L, J, 2) -> (B, target_len, J, 2). One warp-factor draw (one TimeWarp
    forward()) applied to every sequence; natural layout, no transposes."""
    B, L, J, C = seqs.shape
    F = J * C
    if factor is None:
        # TODO(synk): original TimeWarp draws a fresh factor from global `random`
        # on every forward(); here the draw is deterministic via rng_seed (or pass
        # `factor=` explicitly, e.g. random.uniform(min_scale, max_scale)).
        factor = random.Random(rng_seed).uniform(min_scale, max_scale)

    x = seqs.astype(jnp.float32).reshape(B, L * F)     # free row-major view

    mat_bytes = (L * F) * (target_len * F) * 4
    if B < min_batch_for_pallas or mat_bytes > _VMEM_BUDGET // 2:
        # Too little work (or Kron matrix too big for VMEM): plain XLA einsum
        # with the un-expanded fused weights.
        w = jnp.asarray(_fused_resample_matrix(L, target_len, factor).astype(np.float32))
        out = jnp.einsum("tl,blf->btf", w, x.reshape(B, L, F)).astype(out_dtype)
        return out.reshape(B, target_len, J, C)

    m = _warp_kron_matrix(L, F, target_len, factor)    # (L*F, T*F) f32
    out = _resample_pallas(x, m, out_dtype)            # (B, T*F)
    return out.reshape(B, target_len, J, C)


def time_warp(seq: jnp.ndarray,
              min_scale: float = 0.9,
              max_scale: float = 1.1,
              target_len: int = 32,
              rng_seed: int = 0,
              factor: float = None) -> jnp.ndarray:
    """Single-sample forward matching TimeWarp.forward: (L, J, 2) -> (target_len, J, 2)."""
    return time_warp_batch(seq[None], min_scale, max_scale, target_len,
                           rng_seed, factor)[0]


if __name__ == "__main__":
    key = jax.random.PRNGKey(0)
    B, L, J, C, T = 32, 16, 4, 2, 32
    seqs = jax.random.normal(key, (B, L, J, C), dtype=jnp.float32)

    out_b = jax.block_until_ready(time_warp_batch(seqs, 0.9, 1.1, T, rng_seed=0))
    out_1 = jax.block_until_ready(time_warp(seqs[0], 0.9, 1.1, T, rng_seed=0))

    # Pure-numpy float64 reference of the fused two-step resample (same factor).
    rng = random.Random(0)
    factor = rng.uniform(0.9, 1.1)
    L_new = max(2, int(L * factor))
    w_ref = _interp_matrix(L_new, T) @ _interp_matrix(L, L_new)   # (T, L) f64
    ref = np.einsum("tl,bljc->btjc", w_ref, np.asarray(seqs, dtype=np.float64))

    assert out_b.shape == (B, T, J, C) and out_b.dtype == jnp.float32
    assert out_1.shape == (T, J, C) and out_1.dtype == jnp.float32
    err_b = float(np.max(np.abs(np.asarray(out_b, dtype=np.float64) - ref)))
    err_1 = float(np.max(np.abs(np.asarray(out_1, dtype=np.float64) - ref[0])))
    assert err_b < 1e-4, f"batch path error {err_b}"
    assert err_1 < 1e-4, f"single-sample path error {err_1}"

    print("KERNEL_OK")
</pallas_src>

<mosaic_0001>
module attributes {stable_mosaic.version = 11 : i64} {
  func.func @_timewarp_kernel(%arg0: i32, %arg1: memref<32x128xf32, #tpu.memory_space<vmem>>, %arg2: memref<128x256xf32, #tpu.memory_space<vmem>>, %arg3: memref<32x256xf32, #tpu.memory_space<vmem>>) attributes {dimension_semantics = [#tpu.dimension_semantics<parallel>], iteration_bounds = array<i64: 1>, scalar_prefetch = 0 : i64, scratch_operands = 0 : i64, tpu.core_type = #tpu.core_type<tc>, window_params = [{transform_indices = @transform_0, window_bounds = array<i64: 32, 128>}, {pipeline_mode = #tpu.pipeline_mode<synchronous>, transform_indices = @transform_1, window_bounds = array<i64: 128, 256>}, {transform_indices = @transform_2, window_bounds = array<i64: 32, 256>}]} {
    %c0 = arith.constant 0 : index
    %c0_0 = arith.constant 0 : index
    %0 = vector.load %arg1[%c0, %c0_0] : memref<32x128xf32, #tpu.memory_space<vmem>>, vector<32x128xf32>
    %c0_1 = arith.constant 0 : index
    %c0_2 = arith.constant 0 : index
    %1 = vector.load %arg2[%c0_1, %c0_2] : memref<128x256xf32, #tpu.memory_space<vmem>>, vector<128x256xf32>
    %cst = arith.constant dense<0.000000e+00> : vector<32x256xf32>
    %2 = tpu.matmul %0, %1, %cst {dimension_numbers = #tpu.dot_dimension_numbers<[1], [0], [0], [1], [0, 0, 1, 1], [], []>} : vector<32x128xf32>, vector<128x256xf32>, vector<32x256xf32> -> vector<32x256xf32>
    %c0_3 = arith.constant 0 : index
    %c0_4 = arith.constant 0 : index
    %3 = vector.load %arg3[%c0_3, %c0_4] : memref<32x256xf32, #tpu.memory_space<vmem>>, vector<32x256xf32>
    tpu.vector_store %arg3[%c0_3, %c0_4], %2 {strides = array<i32>} : memref<32x256xf32, #tpu.memory_space<vmem>>, vector<32x256xf32>,
    return
  }
  func.func @transform_0(%arg0: i32) -> (i32, i32) {
    %c0_i32 = arith.constant 0 : i32
    %c0_i32_0 = arith.constant 0 : i32
    return %arg0, %c0_i32 : i32, i32
  }
  func.func @transform_1(%arg0: i32) -> (i32, i32) {
    %c0_i32 = arith.constant 0 : i32
    %c0_i32_0 = arith.constant 0 : i32
    %c0_i32_1 = arith.constant 0 : i32
    return %c0_i32, %c0_i32_0 : i32, i32
  }
  func.func @transform_2(%arg0: i32) -> (i32, i32) {
    %c0_i32 = arith.constant 0 : i32
    %c0_i32_0 = arith.constant 0 : i32
    return %arg0, %c0_i32 : i32, i32
  }
}

</mosaic_0001>

<llo_original>
// kernel: tpu_custom_call.1
$region0: #{tpu_custom_call.1}
  #allocation0 [shape = 'u32[]', space=smem, size = 0x4, offset = 0x4, fixed_abs, tag = 'smem constant byte address 0x4 - core index']
  #allocation1 [shape = 'u32[144,128]{1,0:T(1,128)}', space=vmem, size = 0x12000, scoped, tag = 'internal scratch']
  %s0 = inlined_call_operand.hbm [shape: f32[32,128], index: 0, kind: input, shape index: {}]
  %s1 = inlined_call_operand.hbm [shape: f32[128,256], index: 1, kind: input, shape index: {}]
  %s2 = inlined_call_operand.hbm [shape: f32[32,256], index: 2, kind: output, shape index: {}]
  %s3 = sld [smem:[#allocation0]]
  $region26: #{tpu_custom_call.1} parent=0
    _
  %s5 = ssub.s32 1, %s3
  %s6 = scalar_select 0, %s5, %s3
  $region1: #{tpu_custom_call.1} parent=0
    #allocation2 [shape = 'u8[16384]{0}', space=vmem, size = 0x4000, scoped, tag = 'input window, operand 0, single buffered']
    #allocation3 [shape = 's32[1]{0}', space=sflag, size = 0x4, scoped, tag = 'scoped memory for tpu_custom_call.1']
    #allocation4 [shape = 's32[1]{0}', space=sflag, size = 0x4, scoped, tag = 'scoped memory for tpu_custom_call.1']
    #allocation5 [shape = 'u8[131072]{0}', space=vmem, size = 0x20000, scoped, tag = 'input window, operand 1, single buffered']
    #allocation6 [shape = 's32[1]{0}', space=sflag, size = 0x4, scoped, tag = 'scoped memory for tpu_custom_call.1']
    #allocation7 [shape = 'u8[32768]{0}', space=vmem, size = 0x8000, scoped, tag = 'output window, operand 0, single buffered']
    %7 = vsyncpa [#allocation3], 0
    %8 = vsyncpa [#allocation6], 0
    %9 = vsyncpa [#allocation4], 0
    // Predicated region
    $region2: #{tpu_custom_call.1} parent=1 // pred_check
      _
    $region3: #{tpu_custom_call.1} parent=1 // pred_check_branch
      %11 = sbr.rel (0) target = $region5
    $region4: #{tpu_custom_call.1} parent=1 // pred_region
      %s13 = ssub.s32 512, 512
      %14 = vsyncadd [#allocation3], %s13
      %s15 = sshll.u32 [#allocation2], 4
      %s16 = int_to_ptr.vmem [resolvable:$true] %s15
      %21 = dma.hbm_to_vmem [thread:$0]  %s0, 512, %s16, [#allocation3], 128, 128, 8
    $region5: #{tpu_custom_call.1} parent=1 // pred_fallthru
      _
    // Predicated region
    $region6: #{tpu_custom_call.1} parent=1 // pred_check
      _
    $region7: #{tpu_custom_call.1} parent=1 // pred_check_branch
      %23 = sbr.rel (0) target = $region9
    $region8: #{tpu_custom_call.1} parent=1 // pred_region
      %s25 = ssub.s32 4096, 4096
      %26 = vsyncadd [#allocation6], %s25
      %s27 = sshll.u32 [#allocation5], 4
      %s28 = int_to_ptr.vmem [resolvable:$true] %s27
      %33 = dma.hbm_to_vmem [thread:$0]  %s1, 4096, %s28, [#allocation6], 256, 256, 16
    $region9: #{tpu_custom_call.1} parent=1 // pred_fallthru
      _
    // Predicated region
    $region10: #{tpu_custom_call.1} parent=1 // pred_check
      _
    $region11: #{tpu_custom_call.1} parent=1 // pred_check_branch
      %35 = sbr.rel (0) target = $region13
    $region12: #{tpu_custom_call.1} parent=1 // pred_region
      %36 = dma.done [#allocation3], 512
    $region13: #{tpu_custom_call.1} parent=1 // pred_fallthru
      _
    // Predicated region
    $region14: #{tpu_custom_call.1} parent=1 // pred_check
      _
    $region15: #{tpu_custom_call.1} parent=1 // pred_check_branch
      %38 = sbr.rel (0) target = $region17
    $region16: #{tpu_custom_call.1} parent=1 // pred_region
      %39 = dma.done [#allocation6], 4096
    $region17: #{tpu_custom_call.1} parent=1 // pred_fallthru
      _
    %v40 = vld [vmem:[#allocation2] sm:$0xff]
    %v41 = vld [vmem:[#allocation2 + $0x8] sm:$0xff]
    %v42 = vld [vmem:[#allocation2 + $0x10] sm:$0xff]
    %v43 = vld [vmem:[#allocation2 + $0x18] sm:$0xff]
    %v44 = vld [vmem:[#allocation5] sm:$0xff]
    %v45 = vld [vmem:[#allocation5 + $0x8] sm:$0xff]
    %v46 = vld [vmem:[#allocation5 + $0x10] sm:$0xff]
    %v47 = vld [vmem:[#allocation5 + $0x18] sm:$0xff]
    %v48 = vld [vmem:[#allocation5 + $0x20] sm:$0xff]
    %v49 = vld [vmem:[#allocation5 + $0x28] sm:$0xff]
    %v50 = vld [vmem:[#allocation5 + $0x30] sm:$0xff]
    %v51 = vld [vmem:[#allocation5 + $0x38] sm:$0xff]
    %v52 = vld [vmem:[#allocation5 + $0x40] sm:$0xff]
    %v53 = vld [vmem:[#allocation5 + $0x48] sm:$0xff]
    %v54 = vld [vmem:[#allocation5 + $0x50] sm:$0xff]
    %v55 = vld [vmem:[#allocation5 + $0x58] sm:$0xff]
    %v56 = vld [vmem:[#allocation5 + $0x60] sm:$0xff]
    %v57 = vld [vmem:[#allocation5 + $0x68] sm:$0xff]
    %v58 = vld [vmem:[#allocation5 + $0x70] sm:$0xff]
    %v59 = vld [vmem:[#allocation5 + $0x78] sm:$0xff]
    %v60 = vld [vmem:[#allocation5 + $0x80] sm:$0xff]
    %v61 = vld [vmem:[#allocation5 + $0x88] sm:$0xff]
    %v62 = vld [vmem:[#allocation5 + $0x90] sm:$0xff]
    %v63 = vld [vmem:[#allocation5 + $0x98] sm:$0xff]
    %v64 = vld [vmem:[#allocation5 + $0xa0] sm:$0xff]
    %v65 = vld [vmem:[#allocation5 + $0xa8] sm:$0xff]
    %v66 = vld [vmem:[#allocation5 + $0xb0] sm:$0xff]
    %v67 = vld [vmem:[#allocation5 + $0xb8] sm:$0xff]
    %v68 = vld [vmem:[#allocation5 + $0xc0] sm:$0xff]
    %v69 = vld [vmem:[#allocation5 + $0xc8] sm:$0xff]
    %v70 = vld [vmem:[#allocation5 + $0xd0] sm:$0xff]
    %v71 = vld [vmem:[#allocation5 + $0xd8] sm:$0xff]
    %v72 = vld [vmem:[#allocation5 + $0xe0] sm:$0xff]
    %v73 = vld [vmem:[#allocation5 + $0xe8] sm:$0xff]
    %v74 = vld [vmem:[#allocation5 + $0xf0] sm:$0xff]
    %v75 = vld [vmem:[#allocation5 + $0xf8] sm:$0xff]
    %76 = vmatprep.subr.mxu0 %v45
    %77 = vmatpush1.msra.mxu0 %v44
    %78 = vmatprep.subr.mxu0 %v47
    %79 = vmatpush1.msra.mxu0 %v46
    %80 = vmatprep.subr.mxu0 %v49
    %81 = vmatpush1.msra.mxu0 %v48
    %82 = vmatprep.subr.mxu0 %v51
    %83 = vmatpush1.msra.mxu0 %v50
    %84 = vmatprep.subr.mxu0 %v53
    %85 = vmatpush1.msra.mxu0 %v52
    %86 = vmatprep.subr.mxu0 %v55
    %87 = vmatpush1.msra.mxu0 %v54
    %88 = vmatprep.subr.mxu0 %v57
    %89 = vmatpush1.msra.mxu0 %v56
    %90 = vmatprep.subr.mxu0 %v59
    %91 = vmatpush1.msra.mxu0 %v58
    %92 = vmatprep.subr.mxu0 %v61
    %93 = vmatpush1.msra.mxu0 %v60
    %94 = vmatprep.subr.mxu0 %v63
    %95 = vmatpush1.msra.mxu0 %v62
    %96 = vmatprep.subr.mxu0 %v65
    %97 = vmatpush1.msra.mxu0 %v64
    %98 = vmatprep.subr.mxu0 %v67
    %99 = vmatpush1.msra.mxu0 %v66
    %100 = vmatprep.subr.mxu0 %v69
    %101 = vmatpush1.msra.mxu0 %v68
    %102 = vmatprep.subr.mxu0 %v71
    %103 = vmatpush1.msra.mxu0 %v70
    %104 = vmatprep.subr.mxu0 %v73
    %105 = vmatpush1.msra.mxu0 %v72
    %106 = vmatprep.subr.mxu0 %v75
    %107 = vmatpush1.msra.mxu0 %v74
    %108 = vmatprep.subr.mxu0 0.0
    %109 = vmatpush1.msra.mxu0 0.0
    %110 = vmatprep.subr.mxu0 0.0
    %111 = vmatpush1.msra.mxu0 0.0
    %112 = vmatprep.subr.mxu0 0.0
    %113 = vmatpush1.msra.mxu0 0.0
    %114 = vmatprep.subr.mxu0 0.0
    %115 = vmatpush1.msra.mxu0 0.0
    %116 = vmatprep.subr.mxu0 0.0
    %117 = vmatpush1.msra.mxu0 0.0
    %118 = vmatprep.subr.mxu0 0.0
    %119 = vmatpush1.msra.mxu0 0.0
    %120 = vmatprep.subr.mxu0 0.0
    %121 = vmatpush1.msra.mxu0 0.0
    %122 = vmatprep.subr.mxu0 0.0
    %123 = vmatpush1.msra.mxu0 0.0
    %124 = vmatprep.subr.mxu0 0.0
    %125 = vmatpush1.msra.mxu0 0.0
    %126 = vmatprep.subr.mxu0 0.0
    %127 = vmatpush1.msra.mxu0 0.0
    %128 = vmatprep.subr.mxu0 0.0
    %129 = vmatpush1.msra.mxu0 0.0
    %130 = vmatprep.subr.mxu0 0.0
    %131 = vmatpush1.msra.mxu0 0.0
    %132 = vmatprep.subr.mxu0 0.0
    %133 = vmatpush1.msra.mxu0 0.0
    %134 = vmatprep.subr.mxu0 0.0
    %135 = vmatpush1.msra.mxu0 0.0
    %136 = vmatprep.subr.mxu0 0.0
    %137 = vmatpush1.msra.mxu0 0.0
    %138 = vmatprep.subr.mxu0 0.0
    %139 = vmatpush1.msra.mxu0 0.0
    %140 = vmatprep.mubr.f32.mxu0 0.0
    %141 = vmatmul.mubr.f32.gmra.mrb[0].mxu0 %v40
    %v142 = vpop.f32.mrb[0].mxu0
    %v143 = vadd.f32 0.0, %v142
    %v144 = vpop.f32.mrb[0].mxu0
    %v145 = vadd.f32 0.0, %v144
    %146 = vmatprep.mubr.f32.mxu0 0.0
    %147 = vmatmul.mubr.f32.gmra.mrb[0].mxu0 %v41
    %v148 = vpop.f32.mrb[0].mxu0
    %v149 = vadd.f32 0.0, %v148
    %v150 = vpop.f32.mrb[0].mxu0
    %v151 = vadd.f32 0.0, %v150
    %152 = vmatprep.mubr.f32.mxu0 0.0
    %153 = vmatmul.mubr.f32.gmra.mrb[0].mxu0 %v42
    %v154 = vpop.f32.mrb[0].mxu0
    %v155 = vadd.f32 0.0, %v154
    %v156 = vpop.f32.mrb[0].mxu0
    %v157 = vadd.f32 0.0, %v156
    %158 = vmatprep.mubr.f32.mxu0 0.0
    %159 = vmatmul.mubr.f32.gmra.mrb[0].mxu0 %v43
    %v160 = vpop.f32.mrb[0].mxu0
    %v161 = vadd.f32 0.0, %v160
    %v162 = vpop.f32.mrb[0].mxu0
    %v163 = vadd.f32 0.0, %v162
    %164 = vdwg.mxu0
    %165 = vst [vmem:[#allocation7] sm:$0xff] %v143
    %166 = vst [vmem:[#allocation7 + $0x8] sm:$0xff] %v145
    %167 = vst [vmem:[#allocation7 + $0x10] sm:$0xff] %v149
    %168 = vst [vmem:[#allocation7 + $0x18] sm:$0xff] %v151
    %169 = vst [vmem:[#allocation7 + $0x20] sm:$0xff] %v155
    %170 = vst [vmem:[#allocation7 + $0x28] sm:$0xff] %v157
    %171 = vst [vmem:[#allocation7 + $0x30] sm:$0xff] %v161
    %172 = vst [vmem:[#allocation7 + $0x38] sm:$0xff] %v163
    // Predicated region
    $region18: #{tpu_custom_call.1} parent=1 // pred_check
      _
    $region19: #{tpu_custom_call.1} parent=1 // pred_check_branch
      %174 = sbr.rel (0) target = $region21
    $region20: #{tpu_custom_call.1} parent=1 // pred_region
      %s176 = ssub.s32 1024, 1024
      %177 = vsyncadd [#allocation4], %s176
      %s178 = sshll.u32 [#allocation7], 4
      %s179 = int_to_ptr.vmem [resolvable:$true] %s178
      %184 = dma.vmem_to_hbm [thread:$0]  %s179, 1024, %s2, [#allocation4], 256, 256, 16
    $region21: #{tpu_custom_call.1} parent=1 // pred_fallthru
      _
    // Predicated region
    $region22: #{tpu_custom_call.1} parent=1 // pred_check
      _
    $region23: #{tpu_custom_call.1} parent=1 // pred_check_branch
      %186 = sbr.rel (0) target = $region25
    $region24: #{tpu_custom_call.1} parent=1 // pred_region
      %187 = dma.done [#allocation4], 1024
    $region25: #{tpu_custom_call.1} parent=1 // pred_fallthru
      _
    %188 = vsyncpa [#allocation3], 1
    %189 = vsyncpa [#allocation6], 1
    %190 = vsyncpa [#allocation4], 1

</llo_original>
